<compile_context>
chip_gen: v5e
topology: v5e:2x2
jax: 0.10.0
libtpu: 0.0.40
codegen_flags: <defaults>
</compile_context>

<pallas_src>
import math
import functools
import numpy as np
import jax
import jax.numpy as jnp
from jax.experimental import pallas as pl
from jax.experimental.pallas import tpu as pltpu

# ----------------------------------------------------------------------------
# P.862 constants (16 kHz mode)
# ----------------------------------------------------------------------------
Sp_16k = 6.910853e-06

centre_of_band_hz_16k = [7.867213, 31.634144, 63.655895, 96.124611, 129.044968, 162.421738, 196.259659, 230.563568, 265.338348, 300.588867, 336.320129, 372.53714, 409.244934, 446.448578, 484.568604, 526.600586, 570.303833, 619.42334, 672.121643, 728.525696, 785.675964, 846.835693, 909.69165, 977.063293, 1049.861694, 1129.635986, 1217.257568, 1312.109497, 1412.501465, 1517.99939, 1628.894165, 1746.194336, 1871.568848, 2008.776123, 2158.979248, 2326.743164, 2513.787109, 2722.48877, 2952.58667, 3205.835449, 3492.679932, 3820.219238, 4193.938477, 4619.846191, 5100.437012, 5636.199219, 6234.313477, 6946.734863, 7796.473633]

nr_of_hz_bands_per_bark_band_16k = [1, 1, 1, 1, 1, 1, 1, 1, 2, 1, 1, 1, 1, 1, 2, 1, 1, 2, 2, 2, 2, 2, 2, 2, 2, 3, 3, 3, 3, 4, 3, 4, 5, 4, 5, 6, 6, 7, 8, 9, 9, 12, 12, 15, 16, 18, 21, 25, 20]

pow_dens_correction_factor_16k = [100.0, 99.999992, 100.0, 100.000008, 100.000008, 100.000015, 99.999992, 99.999969, 50.000027, 100.0, 99.999969, 100.000015, 99.999947, 100.000061, 53.047077, 110.000046, 117.991989, 65.0, 68.760147, 69.999931, 71.428818, 75.000038, 76.843384, 80.968781, 88.646126, 63.864388, 68.15535, 72.547775, 75.584831, 58.379192, 80.950836, 64.135651, 54.384785, 73.821884, 64.437073, 59.176456, 65.521278, 61.399822, 58.144047, 57.004543, 64.126297, 54.311001, 61.114979, 55.077751, 56.849335, 55.628868, 53.137054, 54.985844, 79.546974]

width_of_band_bark_16k = [0.157344, 0.317994, 0.322441, 0.326934, 0.331474, 0.336061, 0.340697, 0.345381, 0.350114, 0.354897, 0.359729, 0.364611, 0.369544, 0.374529, 0.379565, 0.384653, 0.389794, 0.394989, 0.400236, 0.405538, 0.410894, 0.416306, 0.421773, 0.427297, 0.432877, 0.438514, 0.444209, 0.449962, 0.455774, 0.461645, 0.467577, 0.473569, 0.479621, 0.485736, 0.491912, 0.498151, 0.504454, 0.510819, 0.51725, 0.523745, 0.530308, 0.536934, 0.543629, 0.55039, 0.55722, 0.564119, 0.571085, 0.578125, 0.585232]

width_of_band_hz_16k = [15.734426, 31.799433, 32.244064, 32.693359, 33.147385, 33.60614, 34.069702, 34.538116, 35.011429, 35.489655, 35.97287, 36.461121, 36.954407, 37.452911, 40.269653, 42.311859, 45.992554, 51.348511, 55.040527, 56.775208, 58.699402, 62.445862, 64.820923, 69.195374, 76.745667, 84.016235, 90.825684, 97.931152, 103.348877, 107.80188, 113.552246, 121.490601, 130.42041, 143.431763, 158.486816, 176.872803, 198.314697, 219.549561, 240.600098, 268.702393, 306.060059, 349.937012, 398.686279, 454.713867, 506.841797, 564.86377, 637.26123, 794.717285, 931.068359]


def interp(values, nelms_new: int) -> np.ndarray:
    """Linear interpolation equivalent to scipy.interpolate.interp1d sampled at
    np.linspace(0, 49.0, nelms_new, endpoint=False)."""
    nelms = len(values)
    xs = np.linspace(0.0, 49.0, nelms_new, endpoint=False)
    return np.interp(xs, np.arange(nelms), np.asarray(values, dtype=np.float64))


def _build_bark_params_np(nfreqs: int = 256, nbarks: int = 49):
    """Deterministically build BarkScale parameters in numpy (mirrors __init__)."""
    pow_dens_correction = (interp(pow_dens_correction_factor_16k, nbarks) * Sp_16k).astype(np.float32)
    width_hz = interp(width_of_band_hz_16k, nbarks).astype(np.float32)
    centre = interp(centre_of_band_hz_16k, nbarks).astype(np.float32)

    fbank = np.zeros((nbarks, nfreqs), dtype=np.float32)
    if nfreqs == 256 and nbarks == 49:
        current = 0
        for i in range(nbarks):
            end = current + nr_of_hz_bands_per_bark_band_16k[i]
            fbank[i, current:end] = 1.0
            current = end
    else:
        prev, bin_width = 0, 8000.0 / nfreqs
        for i in range(nbarks):
            stride = width_hz[i] / bin_width
            c = centre[i] / bin_width
            start = max(prev, int(math.floor(c - stride / 2)))
            end = min(nfreqs, int(math.ceil(c + stride / 2)))
            fbank[i, start:end] = 1.0
            prev = end
    return fbank, pow_dens_correction


def build_bark_params(nfreqs: int = 256, nbarks: int = 49):
    fbank, corr = _build_bark_params_np(nfreqs, nbarks)
    return jnp.asarray(fbank), jnp.asarray(corr)


@functools.lru_cache(maxsize=None)
def fused_bark_weight(nfreqs: int = 256, nbarks: int = 49):
    """(nfreqs, nbarks) transposed filterbank with pow_dens_correction pre-folded.

    Since fbank is 0/1, sum_j fbank[i,j]*x_j * c_i == sum_j (fbank[i,j]*c_i) * x_j
    (up to ~1 ulp).  Built once per (nfreqs, nbarks) — hoisted out of the forward.
    """
    fbank, corr = _build_bark_params_np(nfreqs, nbarks)
    w = (fbank * corr[:, None]).T.astype(np.float32)
    return jnp.asarray(w)


def _round_up(x: int, m: int) -> int:
    return ((x + m - 1) // m) * m


# ----------------------------------------------------------------------------
# Pallas kernel: row-tiled (TM, nfreqs) @ (nfreqs, nbarks) on the MXU.
# The correction factor is pre-folded into the weights; the extra input bin is
# simply never DMA'd (input block last dim = nfreqs = 256 over a 257-wide array);
# the output is written at its natural 49-band width (no padded write + slice).
# ----------------------------------------------------------------------------
def _bark_kernel(x_ref, w_ref, o_ref):
    # x_ref: (TM, nfreqs)    tile of flattened (batch*frame) rows, first 256 bins
    # w_ref: (nfreqs, nbarks) fused weight (fbank.T * corr), resident every step
    # o_ref: (TM, nbarks)    output tile, written directly at 49 lanes
    o_ref[...] = jnp.dot(
        x_ref[...], w_ref[...], preferred_element_type=jnp.float32
    ).astype(o_ref.dtype)


def bark_forward(x, weight, *, tm: int = 4096, use_pallas=None, pallas_min_rows: int = 2048):
    """x: (batch, frame, nfreqs+1) float32, weight: (nfreqs, nbarks) fused weight.

    Returns (batch, frame, nbarks) float32.

    tm: row tile over the flattened (batch*frame) axis.  4096 amortizes the
        ~0.35us per-grid-step overhead (footprint ~9.6 MiB double-buffered, well
        inside the scoped-VMEM default on v5e/v6e/v7x).  The tile is capped so
        the grid has >=2 steps whenever possible (v7x megacore sharding).
    use_pallas: None = auto (Pallas only when batch*frame >= pallas_min_rows;
        tiny inputs are better fused by XLA), True/False to force.
    """
    batch, frame, nbins = x.shape
    nfreqs, nbarks = weight.shape
    assert nbins == nfreqs + 1, "input last dim must equal nfreqs + 1"

    M = batch * frame
    if use_pallas is None:
        use_pallas = M >= pallas_min_rows
    if not use_pallas:
        # Small-M fallback: launch overhead of a custom call would dominate;
        # let XLA fuse the 256->49 reduction with surrounding STFT/power ops.
        return jnp.einsum("bfj,jk->bfk", x[:, :, :nfreqs], weight)

    # Contiguous reshape only (no copy); keep the full 257-wide last dim in HBM —
    # the BlockSpec below only ever DMAs the first 256 bins of each row.
    x2 = x.reshape(M, nbins)

    # Row tile: multiple of 8 (sublane), >=2 grid steps when possible so both
    # v7x TensorCores get work; fall back to a single full-extent block for
    # very small M (legal: block dim equals the full array dim).
    tm_eff = min(tm, _round_up(max(pl.cdiv(M, 2), 1), 8))
    if tm_eff >= M:
        tm_eff = M
    grid = (pl.cdiv(M, tm_eff),)

    cost = pl.CostEstimate(
        flops=2 * M * nfreqs * nbarks,
        transcendentals=0,
        bytes_accessed=M * nfreqs * 4 + M * nbarks * 4 + nfreqs * nbarks * 4,
    )

    out = pl.pallas_call(
        _bark_kernel,
        out_shape=jax.ShapeDtypeStruct((M, nbarks), jnp.float32),
        grid_spec=pltpu.PrefetchScalarGridSpec(
            num_scalar_prefetch=0,
            grid=grid,
            in_specs=[
                # 256-wide block over a 257-wide array: drops the dead bin at the
                # DMA level (no in-kernel slice, no 384-lane VMEM padding).
                pl.BlockSpec((tm_eff, nfreqs), lambda i: (i, 0)),
                # Constant-index weight block; Pallas skips re-DMA when the block
                # index does not change between grid steps.
                pl.BlockSpec((nfreqs, nbarks), lambda i: (0, 0)),
            ],
            # Last dim 49 equals the full array dim -> legal; masked 49-lane
            # stores cost only store-slot cycles, hidden under the input DMA.
            out_specs=pl.BlockSpec((tm_eff, nbarks), lambda i: (i, 0)),
        ),
        compiler_params=pltpu.CompilerParams(
            # single row axis; "parallel" lets v7x shard grid steps across 2 TCs
            dimension_semantics=("parallel",),
            vmem_limit_bytes=32 * 1024 * 1024,
        ),
        cost_estimate=cost,
    )(x2, weight)

    return out.reshape(batch, frame, nbarks)


# ----------------------------------------------------------------------------
if __name__ == "__main__":
    nfreqs, nbarks = 256, 49
    # M = 42 rows -> tm_eff = 24, grid = 2 (second block partial): exercises both
    # the multi-step megacore path and the masked edge block.
    batch, frame = 2, 21

    fbank, corr = build_bark_params(nfreqs, nbarks)
    weight = fused_bark_weight(nfreqs, nbarks)

    key = jax.random.PRNGKey(0)
    # power spectrogram (non-negative), last dim = nfreqs + 1 as the module expects
    x = jax.random.uniform(key, (batch, frame, nfreqs + 1), dtype=jnp.float32)

    # Force the Pallas path at this small demo size.
    out = bark_forward(x, weight, use_pallas=True)
    out = jax.block_until_ready(out)

    # reference in plain JAX (exact PyTorch formulation) for sanity
    ref = jnp.einsum("ij,klj->kli", fbank, x[:, :, :-1]) * corr.reshape(1, 1, nbarks)
    assert out.shape == (batch, frame, nbarks)
    np.testing.assert_allclose(np.asarray(out), np.asarray(ref), rtol=1e-5, atol=1e-8)

    # also exercise the auto small-M einsum fallback path
    out_small = jax.block_until_ready(bark_forward(x, weight))
    np.testing.assert_allclose(np.asarray(out_small), np.asarray(ref), rtol=1e-5, atol=1e-8)

    # TODO(synk): weighted_norm() is a separate helper (not part of forward) and is
    # not implemented as a kernel here.
    print("KERNEL_OK")
</pallas_src>

<mosaic_0001>
module attributes {stable_mosaic.version = 11 : i64} {
  func.func @_bark_kernel(%arg0: i32, %arg1: memref<24x256xf32, #tpu.memory_space<vmem>>, %arg2: memref<256x49xf32, #tpu.memory_space<vmem>>, %arg3: memref<24x49xf32, #tpu.memory_space<vmem>>) attributes {dimension_semantics = [#tpu.dimension_semantics<parallel>], iteration_bounds = array<i64: 2>, scalar_prefetch = 0 : i64, scratch_operands = 0 : i64, tpu.core_type = #tpu.core_type<tc>, window_params = [{transform_indices = @transform_0, window_bounds = array<i64: 24, 256>}, {pipeline_mode = #tpu.pipeline_mode<synchronous>, transform_indices = @transform_1, window_bounds = array<i64: 256, 49>}, {transform_indices = @transform_2, window_bounds = array<i64: 24, 49>}]} {
    %c0 = arith.constant 0 : index
    %c0_0 = arith.constant 0 : index
    %0 = vector.load %arg1[%c0, %c0_0] : memref<24x256xf32, #tpu.memory_space<vmem>>, vector<24x256xf32>
    %c0_1 = arith.constant 0 : index
    %c0_2 = arith.constant 0 : index
    %1 = vector.load %arg2[%c0_1, %c0_2] : memref<256x49xf32, #tpu.memory_space<vmem>>, vector<256x49xf32>
    %cst = arith.constant dense<0.000000e+00> : vector<24x49xf32>
    %2 = tpu.matmul %0, %1, %cst {dimension_numbers = #tpu.dot_dimension_numbers<[1], [0], [0], [1], [0, 0, 1, 1], [], []>} : vector<24x256xf32>, vector<256x49xf32>, vector<24x49xf32> -> vector<24x49xf32>
    %c0_3 = arith.constant 0 : index
    %c0_4 = arith.constant 0 : index
    %3 = vector.load %arg3[%c0_3, %c0_4] : memref<24x49xf32, #tpu.memory_space<vmem>>, vector<24x49xf32>
    tpu.vector_store %arg3[%c0_3, %c0_4], %2 {strides = array<i32>} : memref<24x49xf32, #tpu.memory_space<vmem>>, vector<24x49xf32>,
    return
  }
  func.func @transform_0(%arg0: i32) -> (i32, i32) {
    %c0_i32 = arith.constant 0 : i32
    %c0_i32_0 = arith.constant 0 : i32
    return %arg0, %c0_i32 : i32, i32
  }
  func.func @transform_1(%arg0: i32) -> (i32, i32) {
    %c0_i32 = arith.constant 0 : i32
    %c0_i32_0 = arith.constant 0 : i32
    %c0_i32_1 = arith.constant 0 : i32
    return %c0_i32, %c0_i32_0 : i32, i32
  }
  func.func @transform_2(%arg0: i32) -> (i32, i32) {
    %c0_i32 = arith.constant 0 : i32
    %c0_i32_0 = arith.constant 0 : i32
    return %arg0, %c0_i32 : i32, i32
  }
}

</mosaic_0001>

<llo_original>
// kernel: tpu_custom_call.1
$region0: #{tpu_custom_call.1}
  #allocation0 [shape = 'u32[]', space=smem, size = 0x4, offset = 0x4, fixed_abs, tag = 'smem constant byte address 0x4 - core index']
  #allocation1 [shape = 'u32[72,128]{1,0:T(1,128)}', space=vmem, size = 0x9000, scoped, tag = 'internal scratch']
  %s0 = inlined_call_operand.vmem [shape: f32[42,257], index: 0, kind: input, shape index: {}]
  %s1 = inlined_call_operand.vmem [shape: f32[256,49], index: 1, kind: input, shape index: {}]
  %s2 = inlined_call_operand.hbm [shape: f32[42,49], index: 2, kind: output, shape index: {}]
  %s3 = sld [smem:[#allocation0]]
  $region64: #{tpu_custom_call.1} parent=0
    _
  %s5 = ssub.s32 1, %s3
  %s6 = scalar_select 0, %s5, %s3
  $region1: #{tpu_custom_call.1} parent=0
    #allocation2 [shape = 'u8[49152]{0}', space=vmem, size = 0xc000, scoped, tag = 'input window, operand 0']
    #allocation3 [shape = 'u8[24576]{0}', space=vmem, size = 0x6000, scoped, tag = 'output window, operand 0']
    #allocation4 [shape = 's32[2]{0}', space=sflag, size = 0x8, scoped, tag = 'scoped memory for tpu_custom_call.1']
    %7 = vsyncpa [#allocation4], 0
    %s8 = scalar_lea.sflag [#allocation4], 1
    %9 = vsyncpa %s8, 0
    loop: start=0, step=1, limit=4
    $region2: #{tpu_custom_call.1} parent=1 // loop_pre_header
      _
    $region3: #{tpu_custom_call.1} parent=1 // loop_header
      %s11 = sphi 0, %s15
      %p12 = scmp.ge.s32.totalorder %s11, 4
      %s21 = sphi 0, %s23
      %s24 = sphi 0, %s21
      %s25 = sphi 0, %s24
      %s41 = sphi 0, %s25
      %s45 = sphi 0, %s45
      %s47 = sphi 0, %s45
      %s48 = sphi 0, %s47
      %s62 = sphi 0, %s48
      %s68 = sphi 0, %s70
      %s71 = sphi 0, %s68
      %s72 = sphi 0, %s71
      %s88 = sphi 0, %s72
    $region4: #{tpu_custom_call.1} parent=1 // loop_header_branch
      %14 = sbr.rel (%p12) target = $region8
    $region5: #{tpu_custom_call.1} parent=1 // loop_body
      %s16 = ssub.s32 %s11, 1
      %s17 = ssub.s32 %s11, 2
      %s18 = sadd.s32 %s11, 1
      %s19 = ssub.s32 %s11, %s18
      %p20 = scmp.eq.s32.totalorder %s19, 0
      %s22 = sadd.s32 %s21, 1
      %s23 = scalar_select %p20, %s21, %s22
      %p26 = pneg %p20
      %p27 = scmp.eq.s32.totalorder %s11, 1
      %p28 = por %p26, %p27
      %p29 = scmp.ne.s32.totalorder %s21, %s24
      %p30 = scmp.eq.s32.totalorder %s11, 0
      %p31 = por %p29, %p30
      %p32 = scmp.ne.s32.totalorder %s21, %s24
      %p33 = scmp.eq.s32.totalorder %s16, 1
      %p34 = por %p32, %p33
      %p35 = scmp.ne.s32.totalorder %s24, %s25
      %p36 = scmp.eq.s32.totalorder %s16, 0
      %p37 = por %p35, %p36
      %p38 = scmp.ne.s32.totalorder %s24, %s25
      %p39 = scmp.eq.s32.totalorder %s17, 1
      %p40 = por %p38, %p39
      %p42 = scmp.ne.s32.totalorder %s25, %s41
      %p43 = scmp.eq.s32.totalorder %s17, 0
      %p44 = por %p42, %p43
      %s46 = sadd.s32 %s45, 1
      %p49 = scmp.eq.s32.totalorder %s11, 1
      %p50 = scmp.ne.s32.totalorder %s45, %s47
      %p51 = scmp.eq.s32.totalorder %s11, 0
      %p52 = por %p50, %p51
      %p53 = scmp.ne.s32.totalorder %s45, %s47
      %p54 = scmp.eq.s32.totalorder %s16, 1
      %p55 = por %p53, %p54
      %p56 = scmp.ne.s32.totalorder %s47, %s48
      %p57 = scmp.eq.s32.totalorder %s16, 0
      %p58 = por %p56, %p57
      %p59 = scmp.ne.s32.totalorder %s47, %s48
      %p60 = scmp.eq.s32.totalorder %s17, 1
      %p61 = por %p59, %p60
      %p63 = scmp.ne.s32.totalorder %s48, %s62
      %p64 = scmp.eq.s32.totalorder %s17, 0
      %p65 = por %p63, %p64
      %s66 = ssub.s32 %s11, %s18
      %p67 = scmp.eq.s32.totalorder %s66, 0
      %s69 = sadd.s32 %s68, 1
      %s70 = scalar_select %p67, %s68, %s69
      %p73 = pneg %p67
      %p74 = scmp.eq.s32.totalorder %s11, 1
      %p75 = por %p73, %p74
      %p76 = scmp.ne.s32.totalorder %s68, %s71
      %p77 = scmp.eq.s32.totalorder %s11, 0
      %p78 = por %p76, %p77
      %p79 = scmp.ne.s32.totalorder %s68, %s71
      %p80 = scmp.eq.s32.totalorder %s16, 1
      %p81 = por %p79, %p80
      %p82 = scmp.ne.s32.totalorder %s71, %s72
      %p83 = scmp.eq.s32.totalorder %s16, 0
      %p84 = por %p82, %p83
      %p85 = scmp.ne.s32.totalorder %s71, %s72
      %p86 = scmp.eq.s32.totalorder %s17, 1
      %p87 = por %p85, %p86
      %p89 = scmp.ne.s32.totalorder %s72, %s88
      %p90 = scmp.eq.s32.totalorder %s17, 0
      %p91 = por %p89, %p90
      %p92 = scmp.le.s32.totalorder 1, %s11
      %p93 = scmp.lt.s32.totalorder %s11, 3
      %p94 = pnand %p92, %p93
      %p95 = pneg %p94
      // Predicated region
      $region9: #{tpu_custom_call.1} parent=5 // pred_check
        _
      $region10: #{tpu_custom_call.1} parent=5 // pred_check_branch
        %97 = sbr.rel (%p94) target = $region12
      $region11: #{tpu_custom_call.1} parent=5 // pred_region
        %s98 = ssub.s32 %s11, 1
        // Predicated region
        $region13: #{tpu_custom_call.1} parent=11 // pred_check
          %p99 = pneg %p58
        $region14: #{tpu_custom_call.1} parent=11 // pred_check_branch
          %101 = sbr.rel (%p99) target = $region16
        $region15: #{tpu_custom_call.1} parent=11 // pred_region
          _
        $region16: #{tpu_custom_call.1} parent=11 // pred_fallthru
          _
      $region12: #{tpu_custom_call.1} parent=5 // pred_fallthru
        _
      %p102 = scmp.lt.s32.totalorder %s11, 2
      // Predicated region
      $region17: #{tpu_custom_call.1} parent=5 // pred_check
        %p103 = pneg %p102
      $region18: #{tpu_custom_call.1} parent=5 // pred_check_branch
        %105 = sbr.rel (%p103) target = $region20
      $region19: #{tpu_custom_call.1} parent=5 // pred_region
        // Predicated region
        $region21: #{tpu_custom_call.1} parent=19 // pred_check
          %p106 = pneg %p31
        $region22: #{tpu_custom_call.1} parent=19 // pred_check_branch
          %108 = sbr.rel (%p106) target = $region24
        $region23: #{tpu_custom_call.1} parent=19 // pred_region
          %s109 = sand.u32 %s21, 1
          %s110 = sand.u32 %s21, 1
          %s111 = smul.addr %s110, 48
          %s112 = scalar_lea.vmem [#allocation2], %s111
          %s113 = smul.u32 3, %s11
          %s114 = smul.addr %s113, 3
          %s115 = smul.addr %s114, 8
          %s116 = scalar_lea.vmem %s0, %s115
          // Predicated region
          $region25: #{tpu_custom_call.1} parent=23 // pred_check
            _
          $region26: #{tpu_custom_call.1} parent=23 // pred_check_branch
            %118 = sbr.rel (0) target = $region28
          $region27: #{tpu_custom_call.1} parent=23 // pred_region
            // Predicated region
            $region29: #{tpu_custom_call.1} parent=27 // pred_check
              _
            $region30: #{tpu_custom_call.1} parent=27 // pred_check_branch
              %120 = sbr.rel (0) target = $region32
            $region31: #{tpu_custom_call.1} parent=27 // pred_region
              loop: start=0, step=1, limit=1
              $region33: #{tpu_custom_call.1} parent=31 // loop_pre_header
                _
              $region34: #{tpu_custom_call.1} parent=31 // loop_header
                %s122 = sphi 0, %s126
                %p123 = scmp.ge.s32.totalorder %s122, 1
                %s127 = sphi %s116, %s116
                %s128 = sphi %s112, %s112
              $region35: #{tpu_custom_call.1} parent=31 // loop_header_branch
                %125 = sbr.rel (%p123) target = $region39
              $region36: #{tpu_custom_call.1} parent=31 // loop_body
                %v129 = vld [vmem:[%s127] sm:$0xff]
                %130 = vst [vmem:[%s128] sm:$0xff] %v129
                %v131 = vld [vmem:[%s127 + $0x8] sm:$0xff]
                %132 = vst [vmem:[%s128 + $0x8] sm:$0xff] %v131
                %v133 = vld [vmem:[%s127 + $0x18] sm:$0xff]
                %134 = vst [vmem:[%s128 + $0x10] sm:$0xff] %v133
                %v135 = vld [vmem:[%s127 + $0x20] sm:$0xff]
                %136 = vst [vmem:[%s128 + $0x18] sm:$0xff] %v135
                %v137 = vld [vmem:[%s127 + $0x30] sm:$0xff]
                %138 = vst [vmem:[%s128 + $0x20] sm:$0xff] %v137
                %v139 = vld [vmem:[%s127 + $0x38] sm:$0xff]
                %140 = vst [vmem:[%s128 + $0x28] sm:$0xff] %v139
              $region37: #{tpu_custom_call.1} parent=31 // loop_footer
                %s126 = sadd.s32 1, %s122
              $region38: #{tpu_custom_call.1} parent=31 // loop_footer_branch
                %121 = sbr.rel target = $region34
              $region39: #{tpu_custom_call.1} parent=31 // loop_exit
                _
            $region32: #{tpu_custom_call.1} parent=27 // pred_fallthru
              _
            // Predicated region
            $region40: #{tpu_custom_call.1} parent=27 // pred_check
              _
            $region41: #{tpu_custom_call.1} parent=27 // pred_check_branch
              %142 = sbr.rel target = $region43
            $region42: #{tpu_custom_call.1} parent=27 // pred_region
              _
            $region43: #{tpu_custom_call.1} parent=27 // pred_fallthru
              _
          $region28: #{tpu_custom_call.1} parent=23 // pred_fallthru
            _
          %143 = vnop
        $region24: #{tpu_custom_call.1} parent=19 // pred_fallthru
          _
      $region20: #{tpu_custom_call.1} parent=5 // pred_fallthru
        _
      %p144 = scmp.le.s32.totalorder 1, %s11
      %p145 = scmp.lt.s32.totalorder %s11, 3
      %p146 = pnand %p144, %p145
      %p147 = pneg %p146
      // Predicated region
      $region44: #{tpu_custom_call.1} parent=5 // pred_check
        _
      $region45: #{tpu_custom_call.1} parent=5 // pred_check_branch
        %149 = sbr.rel (%p146) target = $region47
      $region46: #{tpu_custom_call.1} parent=5 // pred_region
        %s150 = ssub.s32 %s11, 1
        %s151 = sand.u32 %s24, 1
        %s152 = sand.u32 %s24, 1
        %s153 = smul.addr %s152, 48
        %s154 = scalar_lea.vmem [#allocation2], %s153
        // Predicated region
        $region48: #{tpu_custom_call.1} parent=46 // pred_check
          %p155 = pneg %p37
        $region49: #{tpu_custom_call.1} parent=46 // pred_check_branch
          %157 = sbr.rel (%p155) target = $region51
        $region50: #{tpu_custom_call.1} parent=46 // pred_region
          _
        $region51: #{tpu_custom_call.1} parent=46 // pred_fallthru
          _
        %s158 = sand.u32 %s24, 1
        %s159 = sand.u32 %s24, 1
        %s160 = smul.addr %s159, 48
        %s161 = scalar_lea.vmem [#allocation2], %s160
        %p162 = pneg %p37
        %p163 = pneg %p34
        %p164 = pneg %p58
        %p165 = pneg %p55
        %p166 = pneg %p84
        %p167 = pneg %p81
        %s168 = sand.u32 %s71, 1
        %s169 = scalar_lea.sflag [#allocation4], %s168
        %s170 = sand.u32 %s71, 1
        %s171 = smul.addr %s170, 24
        %s172 = scalar_lea.vmem [#allocation3], %s171
        %s173 = smul.u32 3, %s16
        %s174 = smul.u32 3, %s16
        %v175 = vld [vmem:[%s154] sm:$0xff]
        %v176 = vld [vmem:[%s154 + $0x8] sm:$0xff]
        %v177 = vld [vmem:[%s154 + $0x10] sm:$0xff]
        %v178 = vld [vmem:[%s154 + $0x18] sm:$0xff]
        %v179 = vld [vmem:[%s154 + $0x20] sm:$0xff]
        %v180 = vld [vmem:[%s154 + $0x28] sm:$0xff]
        %v181 = vld [vmem:[%s1] sm:$0xff]
        %v182 = vld [vmem:[%s1 + $0x8] sm:$0xff]
        %v183 = vld [vmem:[%s1 + $0x10] sm:$0xff]
        %v184 = vld [vmem:[%s1 + $0x18] sm:$0xff]
        %v185 = vld [vmem:[%s1 + $0x20] sm:$0xff]
        %v186 = vld [vmem:[%s1 + $0x28] sm:$0xff]
        %v187 = vld [vmem:[%s1 + $0x30] sm:$0xff]
        %v188 = vld [vmem:[%s1 + $0x38] sm:$0xff]
        %v189 = vld [vmem:[%s1 + $0x40] sm:$0xff]
        %v190 = vld [vmem:[%s1 + $0x48] sm:$0xff]
        %v191 = vld [vmem:[%s1 + $0x50] sm:$0xff]
        %v192 = vld [vmem:[%s1 + $0x58] sm:$0xff]
        %v193 = vld [vmem:[%s1 + $0x60] sm:$0xff]
        %v194 = vld [vmem:[%s1 + $0x68] sm:$0xff]
        %v195 = vld [vmem:[%s1 + $0x70] sm:$0xff]
        %v196 = vld [vmem:[%s1 + $0x78] sm:$0xff]
        %v197 = vld [vmem:[%s1 + $0x80] sm:$0xff]
        %v198 = vld [vmem:[%s1 + $0x88] sm:$0xff]
        %v199 = vld [vmem:[%s1 + $0x90] sm:$0xff]
        %v200 = vld [vmem:[%s1 + $0x98] sm:$0xff]
        %v201 = vld [vmem:[%s1 + $0xa0] sm:$0xff]
        %v202 = vld [vmem:[%s1 + $0xa8] sm:$0xff]
        %v203 = vld [vmem:[%s1 + $0xb0] sm:$0xff]
        %v204 = vld [vmem:[%s1 + $0xb8] sm:$0xff]
        %v205 = vld [vmem:[%s1 + $0xc0] sm:$0xff]
        %v206 = vld [vmem:[%s1 + $0xc8] sm:$0xff]
        %v207 = vld [vmem:[%s1 + $0xd0] sm:$0xff]
        %v208 = vld [vmem:[%s1 + $0xd8] sm:$0xff]
        %v209 = vld [vmem:[%s1 + $0xe0] sm:$0xff]
        %v210 = vld [vmem:[%s1 + $0xe8] sm:$0xff]
        %v211 = vld [vmem:[%s1 + $0xf0] sm:$0xff]
        %v212 = vld [vmem:[%s1 + $0xf8] sm:$0xff]
        %213 = vmatpush.msra.mxu0 %v196
        %214 = vmatpush.msra.mxu0 %v195
        %215 = vmatpush.msra.mxu0 %v194
        %216 = vmatpush.msra.mxu0 %v193
        %217 = vmatpush.msra.mxu0 %v192
        %218 = vmatpush.msra.mxu0 %v191
        %219 = vmatpush.msra.mxu0 %v190
        %220 = vmatpush.msra.mxu0 %v189
        %221 = vmatpush.msra.mxu0 %v188
        %222 = vmatpush.msra.mxu0 %v187
        %223 = vmatpush.msra.mxu0 %v186
        %224 = vmatpush.msra.mxu0 %v185
        %225 = vmatpush.msra.mxu0 %v184
        %226 = vmatpush.msra.mxu0 %v183
        %227 = vmatpush.msra.mxu0 %v182
        %228 = vmatpush.msra.mxu0 %v181
        %229 = vmatmul.f32.gmra.mxu0 %v175
        %v230 = vpop.f32.mrf.mxu0
        %v231 = vadd.f32 0.0, %v230
        %232 = vmatmul.f32.gmra.mxu0 %v177
        %v233 = vpop.f32.mrf.mxu0
        %v234 = vadd.f32 0.0, %v233
        %235 = vmatmul.f32.gmra.mxu0 %v179
        %v236 = vpop.f32.mrf.mxu0
        %v237 = vadd.f32 0.0, %v236
        %238 = vdwg.mxu0
        %239 = vmatpush.msra.mxu0 %v212
        %240 = vmatpush.msra.mxu0 %v211
        %241 = vmatpush.msra.mxu0 %v210
        %242 = vmatpush.msra.mxu0 %v209
        %243 = vmatpush.msra.mxu0 %v208
        %244 = vmatpush.msra.mxu0 %v207
        %245 = vmatpush.msra.mxu0 %v206
        %246 = vmatpush.msra.mxu0 %v205
        %247 = vmatpush.msra.mxu0 %v204
        %248 = vmatpush.msra.mxu0 %v203
        %249 = vmatpush.msra.mxu0 %v202
        %250 = vmatpush.msra.mxu0 %v201
        %251 = vmatpush.msra.mxu0 %v200
        %252 = vmatpush.msra.mxu0 %v199
        %253 = vmatpush.msra.mxu0 %v198
        %254 = vmatpush.msra.mxu0 %v197
        %255 = vmatmul.f32.gmra.mxu0 %v176
        %v256 = vpop.f32.mrf.mxu0
        %v257 = vadd.f32 %v231, %v256
        %258 = vmatmul.f32.gmra.mxu0 %v178
        %v259 = vpop.f32.mrf.mxu0
        %v260 = vadd.f32 %v234, %v259
        %261 = vmatmul.f32.gmra.mxu0 %v180
        %v262 = vpop.f32.mrf.mxu0
        %v263 = vadd.f32 %v237, %v262
        %264 = vdwg.mxu0
        %vm265 = vcmask 400384
        %266 = vst.msk [vmem:[%s172] sm:$0xff] %vm265, %v257
        %267 = vst.msk [vmem:[%s172 + $0x8] sm:$0xff] %vm265, %v260
        %268 = vst.msk [vmem:[%s172 + $0x10] sm:$0xff] %vm265, %v263
        %s269 = sand.u32 %s71, 1
        %s270 = scalar_lea.sflag [#allocation4], %s269
        %s271 = sand.u32 %s71, 1
        %s272 = smul.addr %s271, 24
        %s273 = scalar_lea.vmem [#allocation3], %s272
        // Predicated region
        $region52: #{tpu_custom_call.1} parent=46 // pred_check
          %p274 = pneg %p81
        $region53: #{tpu_custom_call.1} parent=46 // pred_check_branch
          %276 = sbr.rel (%p274) target = $region55
        $region54: #{tpu_custom_call.1} parent=46 // pred_region
          %s277 = smul.u32 3, %s16
          %279 = vsyncadd %s270, 0
          %s280 = smul.addr %s277, 8
          %s281 = scalar_lea.hbm %s2, %s280
          %s282 = sshll.u32 %s273, 4
          %s283 = int_to_ptr.vmem [resolvable:$true] %s282
          %s284 = sshll.u32 %s281, 4
          %s285 = int_to_ptr.hbm [resolvable:$true] %s284
          %290 = dma.vmem_to_hbm [thread:$0]  %s283, 384, %s285, %s270, 128, 128, 8
        $region55: #{tpu_custom_call.1} parent=46 // pred_fallthru
          _
      $region47: #{tpu_custom_call.1} parent=5 // pred_fallthru
        _
      %p291 = scmp.le.s32.totalorder 2, %s11
      // Predicated region
      $region56: #{tpu_custom_call.1} parent=5 // pred_check
        %p292 = pneg %p291
      $region57: #{tpu_custom_call.1} parent=5 // pred_check_branch
        %294 = sbr.rel (%p292) target = $region59
      $region58: #{tpu_custom_call.1} parent=5 // pred_region
        %s295 = ssub.s32 %s11, 2
        // Predicated region
        $region60: #{tpu_custom_call.1} parent=58 // pred_check
          %p296 = pneg %p87
        $region61: #{tpu_custom_call.1} parent=58 // pred_check_branch
          %298 = sbr.rel (%p296) target = $region63
        $region62: #{tpu_custom_call.1} parent=58 // pred_region
          %s299 = sand.u32 %s72, 1
          %s300 = scalar_lea.sflag [#allocation4], %s299
          %s301 = sand.u32 %s72, 1
          %s302 = smul.addr %s301, 24
          %s303 = scalar_lea.vmem [#allocation3], %s302
          %305 = dma.done %s300, 384
        $region63: #{tpu_custom_call.1} parent=58 // pred_fallthru
          _
      $region59: #{tpu_custom_call.1} parent=5 // pred_fallthru
        _
    $region6: #{tpu_custom_call.1} parent=1 // loop_footer
      %s15 = sadd.s32 1, %s11
    $region7: #{tpu_custom_call.1} parent=1 // loop_footer_branch
      %10 = sbr.rel target = $region3
    $region8: #{tpu_custom_call.1} parent=1 // loop_exit
      _
    %306 = vsyncpa [#allocation4], 1
    %s307 = scalar_lea.sflag [#allocation4], 1
    %308 = vsyncpa %s307, 1

</llo_original>
